<compile_context>
chip_gen: v5e
topology: v5e:2x2
jax: 0.10.0
libtpu: 0.0.40
codegen_flags: <defaults>
</compile_context>

<pallas_src>
import math

import jax
import jax.numpy as jnp
from jax.experimental import pallas as pl
from jax.experimental.pallas import tpu as pltpu


def _gaussian_loss_kernel(delta_ref, logstd_ref, m_ref, out_ref):
    d = delta_ref[...]
    ls = logstd_ref[...]
    m = m_ref[...].astype(d.dtype)          # mask may arrive as bool/int8/bf16
    res = (0.5 * d * d + ls) * m            # == 0.5 * ((d^2 + 2*ls) * m)
    if res.dtype != out_ref.dtype:
        res = res.astype(out_ref.dtype)
    out_ref[...] = res


def _reference(delta_norm, logstd, M_obs):
    """Pure-JAX reference mirroring the PyTorch forward."""
    return 0.5 * ((delta_norm ** 2 + 2.0 * logstd) *
                  M_obs.astype(jnp.result_type(delta_norm, logstd)))


def gaussian_loss(delta_norm, logstd, M_obs, *,
                  lane_width=512,
                  target_block_bytes=3 << 19,      # ~1.5 MiB per array per block
                  min_pallas_bytes=256 * 1024):
    """Fused elementwise GaussianLoss.

    Accepts arrays of any (matching) shape. Internally flattened and reshaped
    to a lane-dense (rows, lane_width) slab; rows are tiled by a 1-D
    "parallel" grid.  Below `min_pallas_bytes` of total HBM traffic the plain
    jnp expression is returned so XLA can fuse it into the surrounding graph.
    """
    assert delta_norm.shape == logstd.shape == M_obs.shape
    shape = delta_norm.shape
    out_dtype = jnp.result_type(delta_norm.dtype, logstd.dtype)

    n = math.prod(shape) if len(shape) else 1
    itemsize = jnp.dtype(out_dtype).itemsize
    approx_traffic = n * itemsize * 4        # 3 reads + 1 write, f32-equivalent

    # Tiny inputs: launch overhead dwarfs the math -> let XLA fuse it.
    if n == 0 or approx_traffic < min_pallas_bytes:
        return _reference(delta_norm, logstd, M_obs).astype(out_dtype)

    # ---- lane-dense flatten: (n,) -> (rows, C), C a big multiple of 128 ----
    C = lane_width
    rows = -(-n // C)                        # ceil
    padded = rows * C
    pad = padded - n

    def prep(x):
        x = x.reshape(-1)
        if pad:
            x = jnp.pad(x, (0, pad))
        return x.reshape(rows, C)

    d2, l2, m2 = prep(delta_norm), prep(logstd), prep(M_obs)

    # ---- block sizing: ~target_block_bytes per array, sublane-aligned ------
    br = max(8, (target_block_bytes // (C * itemsize)) // 8 * 8)
    br = min(rows, br)
    # v7x megacore: make sure there are >=2 grid steps when rows allow it.
    if br == rows and rows >= 16:
        br = min(rows, ((rows + 1) // 2 + 7) // 8 * 8)

    grid = (pl.cdiv(rows, br),)
    spec = pl.BlockSpec((br, C), lambda i: (i, 0))

    out2 = pl.pallas_call(
        _gaussian_loss_kernel,
        out_shape=jax.ShapeDtypeStruct((rows, C), out_dtype),
        grid=grid,
        in_specs=[spec, spec, spec],
        out_specs=spec,
        compiler_params=pltpu.CompilerParams(
            dimension_semantics=("parallel",)),
    )(d2, l2, m2)

    out = out2.reshape(-1)
    if pad:
        out = out[:n]                        # drop padded tail
    return out.reshape(shape)

# TODO(synk): if the caller only consumes sum(loss), add a fused partial-sum
# output (VMEM accumulator + pl.when finalize) to drop the output stream.


if __name__ == "__main__":
    key = jax.random.PRNGKey(0)
    kd, kl, km = jax.random.split(key, 3)

    # Small shapes consistent with the module: (num_observations, hidden)
    # with hidden=32, like the GRU-ODE state the loss is applied to.
    batch = 8
    hidden = 32

    delta_norm = jax.random.normal(kd, (batch, hidden), jnp.float32)
    logstd = 0.1 * jax.random.normal(kl, (batch, hidden), jnp.float32)
    M_obs = (jax.random.uniform(km, (batch, hidden)) > 0.5).astype(jnp.float32)
    ref = _reference(delta_norm, logstd, M_obs)

    # 1) Force the Pallas path even at this tiny size (exercises the kernel,
    #    the lane-dense reshape and the padded-tail slice).
    out_pallas = gaussian_loss(delta_norm, logstd, M_obs, min_pallas_bytes=0)
    jax.block_until_ready(out_pallas)
    assert out_pallas.shape == (batch, hidden)
    assert jnp.allclose(out_pallas, ref, atol=1e-6, rtol=1e-6), \
        "pallas path mismatch vs reference"

    # 2) Default path at this size is the fused-jnp fallback.
    out_default = gaussian_loss(delta_norm, logstd, M_obs)
    jax.block_until_ready(out_default)
    assert jnp.allclose(out_default, ref, atol=1e-6, rtol=1e-6), \
        "fallback path mismatch vs reference"

    # 3) Narrow (bool) mask through the Pallas path (in-kernel cast).
    M_bool = M_obs > 0.5
    out_bool = gaussian_loss(delta_norm, logstd, M_bool, min_pallas_bytes=0)
    jax.block_until_ready(out_bool)
    assert jnp.allclose(out_bool, ref, atol=1e-6, rtol=1e-6), \
        "bool-mask pallas path mismatch vs reference"

    # 4) Slightly larger 3-D shape with a non-multiple-of-512 flat size to
    #    exercise padding + multi-row tiling.
    d3 = jax.random.normal(kd, (3, 17, 32), jnp.float32)
    l3 = 0.1 * jax.random.normal(kl, (3, 17, 32), jnp.float32)
    m3 = (jax.random.uniform(km, (3, 17, 32)) > 0.5).astype(jnp.float32)
    out3 = gaussian_loss(d3, l3, m3, min_pallas_bytes=0)
    jax.block_until_ready(out3)
    assert jnp.allclose(out3, _reference(d3, l3, m3), atol=1e-6, rtol=1e-6), \
        "3-D pallas path mismatch vs reference"

    print("KERNEL_OK")
</pallas_src>

<mosaic_0001>
module attributes {stable_mosaic.version = 11 : i64} {
  func.func @_gaussian_loss_kernel(%arg0: i32, %arg1: memref<1x512xf32, #tpu.memory_space<vmem>>, %arg2: memref<1x512xf32, #tpu.memory_space<vmem>>, %arg3: memref<1x512xf32, #tpu.memory_space<vmem>>, %arg4: memref<1x512xf32, #tpu.memory_space<vmem>>) attributes {dimension_semantics = [#tpu.dimension_semantics<parallel>], iteration_bounds = array<i64: 1>, scalar_prefetch = 0 : i64, scratch_operands = 0 : i64, tpu.core_type = #tpu.core_type<tc>, window_params = [{transform_indices = @transform_0, window_bounds = array<i64: 1, 512>}, {transform_indices = @transform_1, window_bounds = array<i64: 1, 512>}, {transform_indices = @transform_2, window_bounds = array<i64: 1, 512>}, {transform_indices = @transform_3, window_bounds = array<i64: 1, 512>}]} {
    %c0 = arith.constant 0 : index
    %c0_0 = arith.constant 0 : index
    %0 = vector.load %arg1[%c0, %c0_0] : memref<1x512xf32, #tpu.memory_space<vmem>>, vector<1x512xf32>
    %c0_1 = arith.constant 0 : index
    %c0_2 = arith.constant 0 : index
    %1 = vector.load %arg2[%c0_1, %c0_2] : memref<1x512xf32, #tpu.memory_space<vmem>>, vector<1x512xf32>
    %c0_3 = arith.constant 0 : index
    %c0_4 = arith.constant 0 : index
    %2 = vector.load %arg3[%c0_3, %c0_4] : memref<1x512xf32, #tpu.memory_space<vmem>>, vector<1x512xf32>
    %cst = arith.constant 5.000000e-01 : f32
    %3 = vector.broadcast %cst : f32 to vector<1x512xf32>
    %4 = arith.mulf %3, %0 : vector<1x512xf32>
    %5 = arith.mulf %4, %0 : vector<1x512xf32>
    %6 = arith.addf %5, %1 : vector<1x512xf32>
    %7 = arith.mulf %6, %2 : vector<1x512xf32>
    %c0_5 = arith.constant 0 : index
    %c0_6 = arith.constant 0 : index
    %8 = vector.load %arg4[%c0_5, %c0_6] : memref<1x512xf32, #tpu.memory_space<vmem>>, vector<1x512xf32>
    tpu.vector_store %arg4[%c0_5, %c0_6], %7 {strides = array<i32>} : memref<1x512xf32, #tpu.memory_space<vmem>>, vector<1x512xf32>,
    return
  }
  func.func @transform_0(%arg0: i32) -> (i32, i32) {
    %c0_i32 = arith.constant 0 : i32
    %c0_i32_0 = arith.constant 0 : i32
    return %arg0, %c0_i32 : i32, i32
  }
  func.func @transform_1(%arg0: i32) -> (i32, i32) {
    %c0_i32 = arith.constant 0 : i32
    %c0_i32_0 = arith.constant 0 : i32
    return %arg0, %c0_i32 : i32, i32
  }
  func.func @transform_2(%arg0: i32) -> (i32, i32) {
    %c0_i32 = arith.constant 0 : i32
    %c0_i32_0 = arith.constant 0 : i32
    return %arg0, %c0_i32 : i32, i32
  }
  func.func @transform_3(%arg0: i32) -> (i32, i32) {
    %c0_i32 = arith.constant 0 : i32
    %c0_i32_0 = arith.constant 0 : i32
    return %arg0, %c0_i32 : i32, i32
  }
}

</mosaic_0001>

<llo_original>
// kernel: tpu_custom_call.1
$region0: #{tpu_custom_call.1}
  #allocation0 [shape = 'u32[]', space=smem, size = 0x4, offset = 0x4, fixed_abs, tag = 'smem constant byte address 0x4 - core index']
  #allocation1 [shape = 'u32[72,128]{1,0:T(1,128)}', space=vmem, size = 0x9000, scoped, tag = 'internal scratch']
  %s0 = inlined_call_operand.hbm [shape: f32[1,512], index: 0, kind: input, shape index: {}]
  %s1 = inlined_call_operand.hbm [shape: f32[1,512], index: 1, kind: input, shape index: {}]
  %s2 = inlined_call_operand.hbm [shape: f32[1,512], index: 2, kind: input, shape index: {}]
  %s3 = inlined_call_operand.hbm [shape: f32[1,512], index: 3, kind: output, shape index: {}]
  %s4 = sld [smem:[#allocation0]]
  $region34: #{tpu_custom_call.1} parent=0
    _
  %s6 = ssub.s32 1, %s4
  %s7 = scalar_select 0, %s6, %s4
  $region1: #{tpu_custom_call.1} parent=0
    #allocation2 [shape = 'u8[2048]{0}', space=vmem, size = 0x800, scoped, tag = 'input window, operand 0, single buffered']
    #allocation3 [shape = 's32[1]{0}', space=sflag, size = 0x4, scoped, tag = 'scoped memory for tpu_custom_call.1']
    #allocation4 [shape = 's32[1]{0}', space=sflag, size = 0x4, scoped, tag = 'scoped memory for tpu_custom_call.1']
    #allocation5 [shape = 'u8[2048]{0}', space=vmem, size = 0x800, scoped, tag = 'input window, operand 1, single buffered']
    #allocation6 [shape = 's32[1]{0}', space=sflag, size = 0x4, scoped, tag = 'scoped memory for tpu_custom_call.1']
    #allocation7 [shape = 'u8[2048]{0}', space=vmem, size = 0x800, scoped, tag = 'input window, operand 2, single buffered']
    #allocation8 [shape = 'u8[2048]{0}', space=vmem, size = 0x800, scoped, tag = 'output window, operand 0, single buffered']
    %8 = vsyncpa [#allocation3], 0
    %9 = vsyncpa [#allocation6], 0
    %10 = vsyncpa [#allocation4], 0
    // Predicated region
    $region2: #{tpu_custom_call.1} parent=1 // pred_check
      _
    $region3: #{tpu_custom_call.1} parent=1 // pred_check_branch
      %12 = sbr.rel (0) target = $region5
    $region4: #{tpu_custom_call.1} parent=1 // pred_region
      %14 = vsyncadd [#allocation3], 0
      %s16 = sshll.u32 %s0, 4
      %s17 = int_to_ptr.hbm [resolvable:$true] %s16
      %s18 = sshll.u32 [#allocation2], 4
      %s19 = int_to_ptr.vmem [resolvable:$true] %s18
      %21 = dma.hbm_to_vmem [thread:$0]  %s17, 64, %s19, [#allocation3]
    $region5: #{tpu_custom_call.1} parent=1 // pred_fallthru
      _
    // Predicated region
    $region6: #{tpu_custom_call.1} parent=1 // pred_check
      _
    $region7: #{tpu_custom_call.1} parent=1 // pred_check_branch
      %23 = sbr.rel (0) target = $region9
    $region8: #{tpu_custom_call.1} parent=1 // pred_region
      %25 = vsyncadd [#allocation6], 0
      %s27 = sshll.u32 %s1, 4
      %s28 = int_to_ptr.hbm [resolvable:$true] %s27
      %s29 = sshll.u32 [#allocation5], 4
      %s30 = int_to_ptr.vmem [resolvable:$true] %s29
      %32 = dma.hbm_to_vmem [thread:$0]  %s28, 64, %s30, [#allocation6]
    $region9: #{tpu_custom_call.1} parent=1 // pred_fallthru
      _
    // Predicated region
    $region10: #{tpu_custom_call.1} parent=1 // pred_check
      _
    $region11: #{tpu_custom_call.1} parent=1 // pred_check_branch
      %34 = sbr.rel (0) target = $region13
    $region12: #{tpu_custom_call.1} parent=1 // pred_region
      %36 = vsyncadd [#allocation6], 0
      %s38 = sshll.u32 %s2, 4
      %s39 = int_to_ptr.hbm [resolvable:$true] %s38
      %s40 = sshll.u32 [#allocation7], 4
      %s41 = int_to_ptr.vmem [resolvable:$true] %s40
      %43 = dma.hbm_to_vmem [thread:$0]  %s39, 64, %s41, [#allocation6]
    $region13: #{tpu_custom_call.1} parent=1 // pred_fallthru
      _
    // Predicated region
    $region14: #{tpu_custom_call.1} parent=1 // pred_check
      _
    $region15: #{tpu_custom_call.1} parent=1 // pred_check_branch
      %45 = sbr.rel (0) target = $region17
    $region16: #{tpu_custom_call.1} parent=1 // pred_region
      %47 = dma.done [#allocation3], 64
    $region17: #{tpu_custom_call.1} parent=1 // pred_fallthru
      _
    // Predicated region
    $region18: #{tpu_custom_call.1} parent=1 // pred_check
      _
    $region19: #{tpu_custom_call.1} parent=1 // pred_check_branch
      %49 = sbr.rel (0) target = $region21
    $region20: #{tpu_custom_call.1} parent=1 // pred_region
      %51 = dma.done [#allocation6], 64
    $region21: #{tpu_custom_call.1} parent=1 // pred_fallthru
      _
    // Predicated region
    $region22: #{tpu_custom_call.1} parent=1 // pred_check
      _
    $region23: #{tpu_custom_call.1} parent=1 // pred_check_branch
      %53 = sbr.rel (0) target = $region25
    $region24: #{tpu_custom_call.1} parent=1 // pred_region
      %55 = dma.done [#allocation6], 64
    $region25: #{tpu_custom_call.1} parent=1 // pred_fallthru
      _
    %v56 = vld [vmem:[#allocation2] sm:$0xf]
    %v57 = vld [vmem:[#allocation5] sm:$0xf]
    %v58 = vld [vmem:[#allocation7] sm:$0xf]
    %v59 = vmul.f32 %v56, 0.5
    %v60 = vmul.f32 %v59, %v56
    %v61 = vadd.f32 %v60, %v57
    %v62 = vmul.f32 %v61, %v58
    %v63 = vlaneseq
    %vm64 = vcmp.ge.s32.totalorder %v63, 0
    %vm65 = vcmp.lt.s32.totalorder %v63, 512
    %vm66 = vmand %vm64, %vm65
    %67 = vst.msk [vmem:[#allocation8] sm:$0xf] %vm66, %v62
    // Predicated region
    $region26: #{tpu_custom_call.1} parent=1 // pred_check
      _
    $region27: #{tpu_custom_call.1} parent=1 // pred_check_branch
      %69 = sbr.rel (0) target = $region29
    $region28: #{tpu_custom_call.1} parent=1 // pred_region
      %71 = vsyncadd [#allocation4], 0
      %s73 = sshll.u32 [#allocation8], 4
      %s74 = int_to_ptr.vmem [resolvable:$true] %s73
      %s75 = sshll.u32 %s3, 4
      %s76 = int_to_ptr.hbm [resolvable:$true] %s75
      %78 = dma.vmem_to_hbm [thread:$0]  %s74, 64, %s76, [#allocation4]
    $region29: #{tpu_custom_call.1} parent=1 // pred_fallthru
      _
    // Predicated region
    $region30: #{tpu_custom_call.1} parent=1 // pred_check
      _
    $region31: #{tpu_custom_call.1} parent=1 // pred_check_branch
      %80 = sbr.rel (0) target = $region33
    $region32: #{tpu_custom_call.1} parent=1 // pred_region
      %82 = dma.done [#allocation4], 64
    $region33: #{tpu_custom_call.1} parent=1 // pred_fallthru
      _
    %83 = vsyncpa [#allocation3], 1
    %84 = vsyncpa [#allocation6], 1
    %85 = vsyncpa [#allocation4], 1

</llo_original>
